<compile_context>
chip_gen: v6e
topology: v6e:2x2x1
jax: 0.10.0
libtpu: 0.0.40
codegen_flags: <defaults>
</compile_context>

<pallas_src>
import jax
import jax.numpy as jnp
from jax.experimental import pallas as pl
from jax.experimental.pallas import tpu as pltpu


def _leaky_relu(x, slope=0.2):
    return jnp.where(x > 0, x, slope * x)


def generator_kernel(x_ref,
                     w1_ref, b1_ref,
                     w2_ref, b2_ref,
                     w3_ref, b3_ref,
                     w4_ref, b4_ref,
                     w56_ref, b56_ref,
                     o_ref):
    # x: [D, tile_n] bf16 (feature-major; batch rides the lane axis).
    h = x_ref[...]

    def affine(w_ref, b_ref, a):
        # [out, in] @ [in, tile_n] -> [out, tile_n], f32 accumulation on MXU.
        return (jnp.dot(w_ref[...], a, preferred_element_type=jnp.float32)
                + b_ref[...])

    h = _leaky_relu(affine(w1_ref, b1_ref, h)).astype(jnp.bfloat16)
    h = _leaky_relu(affine(w2_ref, b2_ref, h)).astype(jnp.bfloat16)
    h = _leaky_relu(affine(w3_ref, b3_ref, h)).astype(jnp.bfloat16)
    h = _leaky_relu(affine(w4_ref, b4_ref, h)).astype(jnp.bfloat16)
    # Folded layers 5+6 (purely affine), stored in f32.
    o_ref[...] = affine(w56_ref, b56_ref, h).astype(o_ref.dtype)


def generator_forward(x, params, *, tile_n=256):
    """x: [N, D] float32. params: list of (W, b) pairs, W stored as [in, out]."""
    N, D = x.shape
    D2, Dh = 2 * D, D // 2

    (w1, b1), (w2, b2), (w3, b3), (w4, b4), (w5, b5), (w6, b6) = params

    # Fold the final two affine layers into one (no nonlinearity between them).
    w56 = w5 @ w6
    b56 = b5 @ w6 + b6

    layers = [(w1, b1), (w2, b2), (w3, b3), (w4, b4), (w56, b56)]
    # Feature-major weights [out, in] in bf16; biases as [out, 1] f32 columns.
    wts = [jnp.asarray(w.T, dtype=jnp.bfloat16) for (w, _) in layers]
    bss = [jnp.asarray(b, dtype=jnp.float32).reshape(-1, 1) for (_, b) in layers]

    # Pad batch to a multiple of tile_n and flip to [D, Np] (lane = batch).
    n_tiles = pl.cdiv(N, tile_n)
    Np = n_tiles * tile_n
    xT = x.T.astype(jnp.bfloat16)
    if Np != N:
        xT = jnp.pad(xT, ((0, 0), (0, Np - N)))

    grid = (n_tiles,)

    def resident(shape):
        # Whole-array block, identical for every grid step (stays in VMEM).
        return pl.BlockSpec(shape, lambda i: (0, 0))

    in_specs = [pl.BlockSpec((D, tile_n), lambda i: (0, i))]   # activations
    for w, b in zip(wts, bss):
        in_specs.append(resident(w.shape))
        in_specs.append(resident(b.shape))

    out_spec = pl.BlockSpec((D, tile_n), lambda i: (0, i))

    # Advisory cost estimate for XLA's scheduler.
    flops = 2 * Np * (D * D2 + D2 * D + D * Dh + Dh * D + D * D)
    weight_bytes = (sum(int(w.size) * 2 for w in wts)
                    + sum(int(b.size) * 4 for b in bss))
    bytes_accessed = Np * D * 2 + Np * D * 4 + weight_bytes
    cost = pl.CostEstimate(flops=flops, transcendentals=0,
                           bytes_accessed=bytes_accessed)

    operands = [xT]
    for w, b in zip(wts, bss):
        operands += [w, b]

    outT = pl.pallas_call(
        generator_kernel,
        out_shape=jax.ShapeDtypeStruct((D, Np), jnp.float32),
        grid_spec=pltpu.PrefetchScalarGridSpec(
            num_scalar_prefetch=0,
            grid=grid,
            in_specs=in_specs,
            out_specs=out_spec,
        ),
        compiler_params=pltpu.CompilerParams(
            dimension_semantics=("parallel",)),
        cost_estimate=cost,
    )(*operands)

    # Back to batch-major [N, D].
    return outT[:, :N].T


def init_generator_params(key, input_dim):
    """Deterministic init mimicking nn.Linear default (uniform +-1/sqrt(fan_in))."""
    D = input_dim
    dims = [(D, 2 * D), (2 * D, D), (D, D // 2), (D // 2, D), (D, D), (D, D)]
    params = []
    for (fan_in, fan_out) in dims:
        key, kw, kb = jax.random.split(key, 3)
        bound = 1.0 / jnp.sqrt(fan_in)
        # Stored as [in, out] (transposed relative to PyTorch's [out, in]).
        w = jax.random.uniform(kw, (fan_in, fan_out), jnp.float32, -bound, bound)
        b = jax.random.uniform(kb, (fan_out,), jnp.float32, -bound, bound)
        params.append((w, b))
    return params


def generator_reference(x, params):
    """Plain-JAX f32 reference (original 6-layer formulation)."""
    (w1, b1), (w2, b2), (w3, b3), (w4, b4), (w5, b5), (w6, b6) = params
    h = _leaky_relu(x @ w1 + b1)
    h = _leaky_relu(h @ w2 + b2)
    h = _leaky_relu(h @ w3 + b3)
    h = _leaky_relu(h @ w4 + b4)
    h = h @ w5 + b5
    h = h @ w6 + b6
    return h


if __name__ == "__main__":
    key = jax.random.PRNGKey(0)
    key, kx, kp = jax.random.split(key, 3)

    # Batch of entity embeddings, embed_dim = 32.  N=512 gives two 256-row
    # grid steps (both v7x TensorCores get work).
    N, D = 512, 32
    x = jax.random.normal(kx, (N, D), dtype=jnp.float32)
    params = init_generator_params(kp, D)

    out = generator_forward(x, params, tile_n=256)
    out = jax.block_until_ready(out)

    ref = generator_reference(x, params)
    assert out.shape == (N, D)

    # bf16 matmul operands with f32 accumulation -> tolerance relative to the
    # output scale.
    max_err = float(jnp.max(jnp.abs(out - ref)))
    scale = max(1.0, float(jnp.max(jnp.abs(ref))))
    assert max_err <= 5e-2 * scale, f"mismatch vs reference: {max_err} (scale {scale})"

    print("KERNEL_OK")
</pallas_src>

<mosaic_0001>
module attributes {stable_mosaic.version = 11 : i64} {
  func.func @generator_kernel(%arg0: i32, %arg1: memref<32x256xbf16, #tpu.memory_space<vmem>>, %arg2: memref<64x32xbf16, #tpu.memory_space<vmem>>, %arg3: memref<64x1xf32, #tpu.memory_space<vmem>>, %arg4: memref<32x64xbf16, #tpu.memory_space<vmem>>, %arg5: memref<32x1xf32, #tpu.memory_space<vmem>>, %arg6: memref<16x32xbf16, #tpu.memory_space<vmem>>, %arg7: memref<16x1xf32, #tpu.memory_space<vmem>>, %arg8: memref<32x16xbf16, #tpu.memory_space<vmem>>, %arg9: memref<32x1xf32, #tpu.memory_space<vmem>>, %arg10: memref<32x32xbf16, #tpu.memory_space<vmem>>, %arg11: memref<32x1xf32, #tpu.memory_space<vmem>>, %arg12: memref<32x256xf32, #tpu.memory_space<vmem>>) attributes {dimension_semantics = [#tpu.dimension_semantics<parallel>], iteration_bounds = array<i64: 2>, scalar_prefetch = 0 : i64, scratch_operands = 0 : i64, tpu.core_type = #tpu.core_type<tc>, window_params = [{transform_indices = @transform_0, window_bounds = array<i64: 32, 256>}, {pipeline_mode = #tpu.pipeline_mode<synchronous>, transform_indices = @transform_1, window_bounds = array<i64: 64, 32>}, {pipeline_mode = #tpu.pipeline_mode<synchronous>, transform_indices = @transform_2, window_bounds = array<i64: 64, 1>}, {pipeline_mode = #tpu.pipeline_mode<synchronous>, transform_indices = @transform_3, window_bounds = array<i64: 32, 64>}, {pipeline_mode = #tpu.pipeline_mode<synchronous>, transform_indices = @transform_4, window_bounds = array<i64: 32, 1>}, {pipeline_mode = #tpu.pipeline_mode<synchronous>, transform_indices = @transform_5, window_bounds = array<i64: 16, 32>}, {pipeline_mode = #tpu.pipeline_mode<synchronous>, transform_indices = @transform_6, window_bounds = array<i64: 16, 1>}, {pipeline_mode = #tpu.pipeline_mode<synchronous>, transform_indices = @transform_7, window_bounds = array<i64: 32, 16>}, {pipeline_mode = #tpu.pipeline_mode<synchronous>, transform_indices = @transform_8, window_bounds = array<i64: 32, 1>}, {pipeline_mode = #tpu.pipeline_mode<synchronous>, transform_indices = @transform_9, window_bounds = array<i64: 32, 32>}, {pipeline_mode = #tpu.pipeline_mode<synchronous>, transform_indices = @transform_10, window_bounds = array<i64: 32, 1>}, {transform_indices = @transform_11, window_bounds = array<i64: 32, 256>}]} {
    %c0 = arith.constant 0 : index
    %c0_0 = arith.constant 0 : index
    %0 = vector.load %arg1[%c0, %c0_0] : memref<32x256xbf16, #tpu.memory_space<vmem>>, vector<32x256xbf16>
    %c0_1 = arith.constant 0 : index
    %c0_2 = arith.constant 0 : index
    %1 = vector.load %arg2[%c0_1, %c0_2] : memref<64x32xbf16, #tpu.memory_space<vmem>>, vector<64x32xbf16>
    %cst = arith.constant dense<0.000000e+00> : vector<64x256xf32>
    %2 = tpu.matmul %1, %0, %cst {dimension_numbers = #tpu.dot_dimension_numbers<[1], [0], [0], [1], [0, 0, 1, 1], [], []>} : vector<64x32xbf16>, vector<32x256xbf16>, vector<64x256xf32> -> vector<64x256xf32>
    %c0_3 = arith.constant 0 : index
    %c0_4 = arith.constant 0 : index
    %3 = vector.load %arg3[%c0_3, %c0_4] : memref<64x1xf32, #tpu.memory_space<vmem>>, vector<64x1xf32>
    %4 = vector.broadcast %3 : vector<64x1xf32> to vector<64x256xf32>
    %5 = arith.addf %2, %4 : vector<64x256xf32>
    %cst_5 = arith.constant 0.000000e+00 : f32
    %6 = vector.broadcast %cst_5 : f32 to vector<64x256xf32>
    %7 = arith.cmpf ogt, %5, %6 : vector<64x256xf32>
    %cst_6 = arith.constant 2.000000e-01 : f32
    %8 = vector.broadcast %cst_6 : f32 to vector<64x256xf32>
    %9 = arith.mulf %8, %5 : vector<64x256xf32>
    %10 = arith.select %7, %5, %9 : vector<64x256xi1>, vector<64x256xf32>
    %11 = arith.truncf %10 : vector<64x256xf32> to vector<64x256xbf16>
    %c0_7 = arith.constant 0 : index
    %c0_8 = arith.constant 0 : index
    %12 = vector.load %arg4[%c0_7, %c0_8] : memref<32x64xbf16, #tpu.memory_space<vmem>>, vector<32x64xbf16>
    %cst_9 = arith.constant dense<0.000000e+00> : vector<32x256xf32>
    %13 = tpu.matmul %12, %11, %cst_9 {dimension_numbers = #tpu.dot_dimension_numbers<[1], [0], [0], [1], [0, 0, 1, 1], [], []>} : vector<32x64xbf16>, vector<64x256xbf16>, vector<32x256xf32> -> vector<32x256xf32>
    %c0_10 = arith.constant 0 : index
    %c0_11 = arith.constant 0 : index
    %14 = vector.load %arg5[%c0_10, %c0_11] : memref<32x1xf32, #tpu.memory_space<vmem>>, vector<32x1xf32>
    %15 = vector.broadcast %14 : vector<32x1xf32> to vector<32x256xf32>
    %16 = arith.addf %13, %15 : vector<32x256xf32>
    %cst_12 = arith.constant 0.000000e+00 : f32
    %17 = vector.broadcast %cst_12 : f32 to vector<32x256xf32>
    %18 = arith.cmpf ogt, %16, %17 : vector<32x256xf32>
    %cst_13 = arith.constant 2.000000e-01 : f32
    %19 = vector.broadcast %cst_13 : f32 to vector<32x256xf32>
    %20 = arith.mulf %19, %16 : vector<32x256xf32>
    %21 = arith.select %18, %16, %20 : vector<32x256xi1>, vector<32x256xf32>
    %22 = arith.truncf %21 : vector<32x256xf32> to vector<32x256xbf16>
    %c0_14 = arith.constant 0 : index
    %c0_15 = arith.constant 0 : index
    %23 = vector.load %arg6[%c0_14, %c0_15] : memref<16x32xbf16, #tpu.memory_space<vmem>>, vector<16x32xbf16>
    %cst_16 = arith.constant dense<0.000000e+00> : vector<16x256xf32>
    %24 = tpu.matmul %23, %22, %cst_16 {dimension_numbers = #tpu.dot_dimension_numbers<[1], [0], [0], [1], [0, 0, 1, 1], [], []>} : vector<16x32xbf16>, vector<32x256xbf16>, vector<16x256xf32> -> vector<16x256xf32>
    %c0_17 = arith.constant 0 : index
    %c0_18 = arith.constant 0 : index
    %25 = vector.load %arg7[%c0_17, %c0_18] : memref<16x1xf32, #tpu.memory_space<vmem>>, vector<16x1xf32>
    %26 = vector.broadcast %25 : vector<16x1xf32> to vector<16x256xf32>
    %27 = arith.addf %24, %26 : vector<16x256xf32>
    %cst_19 = arith.constant 0.000000e+00 : f32
    %28 = vector.broadcast %cst_19 : f32 to vector<16x256xf32>
    %29 = arith.cmpf ogt, %27, %28 : vector<16x256xf32>
    %cst_20 = arith.constant 2.000000e-01 : f32
    %30 = vector.broadcast %cst_20 : f32 to vector<16x256xf32>
    %31 = arith.mulf %30, %27 : vector<16x256xf32>
    %32 = arith.select %29, %27, %31 : vector<16x256xi1>, vector<16x256xf32>
    %33 = arith.truncf %32 : vector<16x256xf32> to vector<16x256xbf16>
    %c0_21 = arith.constant 0 : index
    %c0_22 = arith.constant 0 : index
    %34 = vector.load %arg8[%c0_21, %c0_22] : memref<32x16xbf16, #tpu.memory_space<vmem>>, vector<32x16xbf16>
    %cst_23 = arith.constant dense<0.000000e+00> : vector<32x256xf32>
    %35 = tpu.matmul %34, %33, %cst_23 {dimension_numbers = #tpu.dot_dimension_numbers<[1], [0], [0], [1], [0, 0, 1, 1], [], []>} : vector<32x16xbf16>, vector<16x256xbf16>, vector<32x256xf32> -> vector<32x256xf32>
    %c0_24 = arith.constant 0 : index
    %c0_25 = arith.constant 0 : index
    %36 = vector.load %arg9[%c0_24, %c0_25] : memref<32x1xf32, #tpu.memory_space<vmem>>, vector<32x1xf32>
    %37 = vector.broadcast %36 : vector<32x1xf32> to vector<32x256xf32>
    %38 = arith.addf %35, %37 : vector<32x256xf32>
    %cst_26 = arith.constant 0.000000e+00 : f32
    %39 = vector.broadcast %cst_26 : f32 to vector<32x256xf32>
    %40 = arith.cmpf ogt, %38, %39 : vector<32x256xf32>
    %cst_27 = arith.constant 2.000000e-01 : f32
    %41 = vector.broadcast %cst_27 : f32 to vector<32x256xf32>
    %42 = arith.mulf %41, %38 : vector<32x256xf32>
    %43 = arith.select %40, %38, %42 : vector<32x256xi1>, vector<32x256xf32>
    %44 = arith.truncf %43 : vector<32x256xf32> to vector<32x256xbf16>
    %c0_28 = arith.constant 0 : index
    %c0_29 = arith.constant 0 : index
    %45 = vector.load %arg10[%c0_28, %c0_29] : memref<32x32xbf16, #tpu.memory_space<vmem>>, vector<32x32xbf16>
    %cst_30 = arith.constant dense<0.000000e+00> : vector<32x256xf32>
    %46 = tpu.matmul %45, %44, %cst_30 {dimension_numbers = #tpu.dot_dimension_numbers<[1], [0], [0], [1], [0, 0, 1, 1], [], []>} : vector<32x32xbf16>, vector<32x256xbf16>, vector<32x256xf32> -> vector<32x256xf32>
    %c0_31 = arith.constant 0 : index
    %c0_32 = arith.constant 0 : index
    %47 = vector.load %arg11[%c0_31, %c0_32] : memref<32x1xf32, #tpu.memory_space<vmem>>, vector<32x1xf32>
    %48 = vector.broadcast %47 : vector<32x1xf32> to vector<32x256xf32>
    %49 = arith.addf %46, %48 : vector<32x256xf32>
    %c0_33 = arith.constant 0 : index
    %c0_34 = arith.constant 0 : index
    %50 = vector.load %arg12[%c0_33, %c0_34] : memref<32x256xf32, #tpu.memory_space<vmem>>, vector<32x256xf32>
    tpu.vector_store %arg12[%c0_33, %c0_34], %49 {strides = array<i32>} : memref<32x256xf32, #tpu.memory_space<vmem>>, vector<32x256xf32>,
    return
  }
  func.func @transform_0(%arg0: i32) -> (i32, i32) {
    %c0_i32 = arith.constant 0 : i32
    %c0_i32_0 = arith.constant 0 : i32
    return %c0_i32, %arg0 : i32, i32
  }
  func.func @transform_1(%arg0: i32) -> (i32, i32) {
    %c0_i32 = arith.constant 0 : i32
    %c0_i32_0 = arith.constant 0 : i32
    %c0_i32_1 = arith.constant 0 : i32
    return %c0_i32, %c0_i32_0 : i32, i32
  }
  func.func @transform_2(%arg0: i32) -> (i32, i32) {
    %c0_i32 = arith.constant 0 : i32
    %c0_i32_0 = arith.constant 0 : i32
    %c0_i32_1 = arith.constant 0 : i32
    return %c0_i32, %c0_i32_0 : i32, i32
  }
  func.func @transform_3(%arg0: i32) -> (i32, i32) {
    %c0_i32 = arith.constant 0 : i32
    %c0_i32_0 = arith.constant 0 : i32
    %c0_i32_1 = arith.constant 0 : i32
    return %c0_i32, %c0_i32_0 : i32, i32
  }
  func.func @transform_4(%arg0: i32) -> (i32, i32) {
    %c0_i32 = arith.constant 0 : i32
    %c0_i32_0 = arith.constant 0 : i32
    %c0_i32_1 = arith.constant 0 : i32
    return %c0_i32, %c0_i32_0 : i32, i32
  }
  func.func @transform_5(%arg0: i32) -> (i32, i32) {
    %c0_i32 = arith.constant 0 : i32
    %c0_i32_0 = arith.constant 0 : i32
    %c0_i32_1 = arith.constant 0 : i32
    return %c0_i32, %c0_i32_0 : i32, i32
  }
  func.func @transform_6(%arg0: i32) -> (i32, i32) {
    %c0_i32 = arith.constant 0 : i32
    %c0_i32_0 = arith.constant 0 : i32
    %c0_i32_1 = arith.constant 0 : i32
    return %c0_i32, %c0_i32_0 : i32, i32
  }
  func.func @transform_7(%arg0: i32) -> (i32, i32) {
    %c0_i32 = arith.constant 0 : i32
    %c0_i32_0 = arith.constant 0 : i32
    %c0_i32_1 = arith.constant 0 : i32
    return %c0_i32, %c0_i32_0 : i32, i32
  }
  func.func @transform_8(%arg0: i32) -> (i32, i32) {
    %c0_i32 = arith.constant 0 : i32
    %c0_i32_0 = arith.constant 0 : i32
    %c0_i32_1 = arith.constant 0 : i32
    return %c0_i32, %c0_i32_0 : i32, i32
  }
  func.func @transform_9(%arg0: i32) -> (i32, i32) {
    %c0_i32 = arith.constant 0 : i32
    %c0_i32_0 = arith.constant 0 : i32
    %c0_i32_1 = arith.constant 0 : i32
    return %c0_i32, %c0_i32_0 : i32, i32
  }
  func.func @transform_10(%arg0: i32) -> (i32, i32) {
    %c0_i32 = arith.constant 0 : i32
    %c0_i32_0 = arith.constant 0 : i32
    %c0_i32_1 = arith.constant 0 : i32
    return %c0_i32, %c0_i32_0 : i32, i32
  }
  func.func @transform_11(%arg0: i32) -> (i32, i32) {
    %c0_i32 = arith.constant 0 : i32
    %c0_i32_0 = arith.constant 0 : i32
    return %c0_i32, %arg0 : i32, i32
  }
}

</mosaic_0001>

<llo_original>
// kernel: tpu_custom_call.1
$region0: #{tpu_custom_call.1}
  #allocation0 [shape = 'u32[]', space=smem, size = 0x4, offset = 0x4, fixed_abs, tag = 'smem constant byte address 0x4 - core index']
  #allocation1 [shape = 'u32[144,128]{1,0:T(1,128)}', space=vmem, size = 0x12000, scoped, tag = 'internal scratch']
  %s0 = inlined_call_operand.vmem [shape: bf16[32,512], index: 0, kind: input, shape index: {}]
  %s1 = inlined_call_operand.vmem [shape: bf16[64,32], index: 1, kind: input, shape index: {}]
  %s2 = inlined_call_operand.vmem [shape: f32[64,1], index: 2, kind: input, shape index: {}]
  %s3 = inlined_call_operand.vmem [shape: bf16[32,64], index: 3, kind: input, shape index: {}]
  %s4 = inlined_call_operand.vmem [shape: f32[32,1], index: 4, kind: input, shape index: {}]
  %s5 = inlined_call_operand.vmem [shape: bf16[16,32], index: 5, kind: input, shape index: {}]
  %s6 = inlined_call_operand.vmem [shape: f32[16,1], index: 6, kind: input, shape index: {}]
  %s7 = inlined_call_operand.vmem [shape: bf16[32,16], index: 7, kind: input, shape index: {}]
  %s8 = inlined_call_operand.vmem [shape: f32[32,1], index: 8, kind: input, shape index: {}]
  %s9 = inlined_call_operand.vmem [shape: bf16[32,32], index: 9, kind: input, shape index: {}]
  %s10 = inlined_call_operand.vmem [shape: f32[32,1], index: 10, kind: input, shape index: {}]
  %s11 = inlined_call_operand.hbm [shape: f32[32,512], index: 11, kind: output, shape index: {}]
  %s12 = sld [smem:[#allocation0]]
  $region115: #{tpu_custom_call.1} parent=0
    _
  %s14 = ssub.s32 1, %s12
  %s15 = scalar_select 0, %s14, %s12
  $region1: #{tpu_custom_call.1} parent=0
    #allocation2 [shape = 'u8[32768]{0}', space=vmem, size = 0x8000, scoped, tag = 'input window, operand 0']
    #allocation3 [shape = 'u8[65536]{0}', space=vmem, size = 0x10000, scoped, tag = 'output window, operand 0']
    #allocation4 [shape = 's32[2]{0}', space=sflag, size = 0x8, scoped, tag = 'scoped memory for tpu_custom_call.1']
    %16 = vsyncpa [#allocation4], 0
    %s17 = scalar_lea.sflag [#allocation4], 1
    %18 = vsyncpa %s17, 0
    loop: start=0, step=1, limit=4
    $region2: #{tpu_custom_call.1} parent=1 // loop_pre_header
      _
    $region3: #{tpu_custom_call.1} parent=1 // loop_header
      %s20 = sphi 0, %s24
      %p21 = scmp.ge.s32.totalorder %s20, 4
      %s30 = sphi 0, %s32
      %s33 = sphi 0, %s30
      %s34 = sphi 0, %s33
      %s50 = sphi 0, %s34
      %s54 = sphi 0, %s54
      %s56 = sphi 0, %s54
      %s57 = sphi 0, %s56
      %s71 = sphi 0, %s57
      %s75 = sphi 0, %s75
      %s77 = sphi 0, %s75
      %s78 = sphi 0, %s77
      %s92 = sphi 0, %s78
      %s96 = sphi 0, %s96
      %s98 = sphi 0, %s96
      %s99 = sphi 0, %s98
      %s113 = sphi 0, %s99
      %s117 = sphi 0, %s117
      %s119 = sphi 0, %s117
      %s120 = sphi 0, %s119
      %s134 = sphi 0, %s120
      %s138 = sphi 0, %s138
      %s140 = sphi 0, %s138
      %s141 = sphi 0, %s140
      %s155 = sphi 0, %s141
      %s159 = sphi 0, %s159
      %s161 = sphi 0, %s159
      %s162 = sphi 0, %s161
      %s176 = sphi 0, %s162
      %s180 = sphi 0, %s180
      %s182 = sphi 0, %s180
      %s183 = sphi 0, %s182
      %s197 = sphi 0, %s183
      %s201 = sphi 0, %s201
      %s203 = sphi 0, %s201
      %s204 = sphi 0, %s203
      %s218 = sphi 0, %s204
      %s222 = sphi 0, %s222
      %s224 = sphi 0, %s222
      %s225 = sphi 0, %s224
      %s239 = sphi 0, %s225
      %s243 = sphi 0, %s243
      %s245 = sphi 0, %s243
      %s246 = sphi 0, %s245
      %s260 = sphi 0, %s246
      %s266 = sphi 0, %s268
      %s269 = sphi 0, %s266
      %s270 = sphi 0, %s269
      %s286 = sphi 0, %s270
    $region4: #{tpu_custom_call.1} parent=1 // loop_header_branch
      %23 = sbr.rel (%p21) target = $region8
    $region5: #{tpu_custom_call.1} parent=1 // loop_body
      %s25 = ssub.s32 %s20, 1
      %s26 = ssub.s32 %s20, 2
      %s27 = sadd.s32 %s20, 1
      %s28 = ssub.s32 %s20, %s27
      %p29 = scmp.eq.s32.totalorder %s28, 0
      %s31 = sadd.s32 %s30, 1
      %s32 = scalar_select %p29, %s30, %s31
      %p35 = pneg %p29
      %p36 = scmp.eq.s32.totalorder %s20, 1
      %p37 = por %p35, %p36
      %p38 = scmp.ne.s32.totalorder %s30, %s33
      %p39 = scmp.eq.s32.totalorder %s20, 0
      %p40 = por %p38, %p39
      %p41 = scmp.ne.s32.totalorder %s30, %s33
      %p42 = scmp.eq.s32.totalorder %s25, 1
      %p43 = por %p41, %p42
      %p44 = scmp.ne.s32.totalorder %s33, %s34
      %p45 = scmp.eq.s32.totalorder %s25, 0
      %p46 = por %p44, %p45
      %p47 = scmp.ne.s32.totalorder %s33, %s34
      %p48 = scmp.eq.s32.totalorder %s26, 1
      %p49 = por %p47, %p48
      %p51 = scmp.ne.s32.totalorder %s34, %s50
      %p52 = scmp.eq.s32.totalorder %s26, 0
      %p53 = por %p51, %p52
      %s55 = sadd.s32 %s54, 1
      %p58 = scmp.eq.s32.totalorder %s20, 1
      %p59 = scmp.ne.s32.totalorder %s54, %s56
      %p60 = scmp.eq.s32.totalorder %s20, 0
      %p61 = por %p59, %p60
      %p62 = scmp.ne.s32.totalorder %s54, %s56
      %p63 = scmp.eq.s32.totalorder %s25, 1
      %p64 = por %p62, %p63
      %p65 = scmp.ne.s32.totalorder %s56, %s57
      %p66 = scmp.eq.s32.totalorder %s25, 0
      %p67 = por %p65, %p66
      %p68 = scmp.ne.s32.totalorder %s56, %s57
      %p69 = scmp.eq.s32.totalorder %s26, 1
      %p70 = por %p68, %p69
      %p72 = scmp.ne.s32.totalorder %s57, %s71
      %p73 = scmp.eq.s32.totalorder %s26, 0
      %p74 = por %p72, %p73
      %s76 = sadd.s32 %s75, 1
      %p79 = scmp.eq.s32.totalorder %s20, 1
      %p80 = scmp.ne.s32.totalorder %s75, %s77
      %p81 = scmp.eq.s32.totalorder %s20, 0
      %p82 = por %p80, %p81
      %p83 = scmp.ne.s32.totalorder %s75, %s77
      %p84 = scmp.eq.s32.totalorder %s25, 1
      %p85 = por %p83, %p84
      %p86 = scmp.ne.s32.totalorder %s77, %s78
      %p87 = scmp.eq.s32.totalorder %s25, 0
      %p88 = por %p86, %p87
      %p89 = scmp.ne.s32.totalorder %s77, %s78
      %p90 = scmp.eq.s32.totalorder %s26, 1
      %p91 = por %p89, %p90
      %p93 = scmp.ne.s32.totalorder %s78, %s92
      %p94 = scmp.eq.s32.totalorder %s26, 0
      %p95 = por %p93, %p94
      %s97 = sadd.s32 %s96, 1
      %p100 = scmp.eq.s32.totalorder %s20, 1
      %p101 = scmp.ne.s32.totalorder %s96, %s98
      %p102 = scmp.eq.s32.totalorder %s20, 0
      %p103 = por %p101, %p102
      %p104 = scmp.ne.s32.totalorder %s96, %s98
      %p105 = scmp.eq.s32.totalorder %s25, 1
      %p106 = por %p104, %p105
      %p107 = scmp.ne.s32.totalorder %s98, %s99
      %p108 = scmp.eq.s32.totalorder %s25, 0
      %p109 = por %p107, %p108
      %p110 = scmp.ne.s32.totalorder %s98, %s99
      %p111 = scmp.eq.s32.totalorder %s26, 1
      %p112 = por %p110, %p111
      %p114 = scmp.ne.s32.totalorder %s99, %s113
      %p115 = scmp.eq.s32.totalorder %s26, 0
      %p116 = por %p114, %p115
      %s118 = sadd.s32 %s117, 1
      %p121 = scmp.eq.s32.totalorder %s20, 1
      %p122 = scmp.ne.s32.totalorder %s117, %s119
      %p123 = scmp.eq.s32.totalorder %s20, 0
      %p124 = por %p122, %p123
      %p125 = scmp.ne.s32.totalorder %s117, %s119
      %p126 = scmp.eq.s32.totalorder %s25, 1
      %p127 = por %p125, %p126
      %p128 = scmp.ne.s32.totalorder %s119, %s120
      %p129 = scmp.eq.s32.totalorder %s25, 0
      %p130 = por %p128, %p129
      %p131 = scmp.ne.s32.totalorder %s119, %s120
      %p132 = scmp.eq.s32.totalorder %s26, 1
      %p133 = por %p131, %p132
      %p135 = scmp.ne.s32.totalorder %s120, %s134
      %p136 = scmp.eq.s32.totalorder %s26, 0
      %p137 = por %p135, %p136
      %s139 = sadd.s32 %s138, 1
      %p142 = scmp.eq.s32.totalorder %s20, 1
      %p143 = scmp.ne.s32.totalorder %s138, %s140
      %p144 = scmp.eq.s32.totalorder %s20, 0
      %p145 = por %p143, %p144
      %p146 = scmp.ne.s32.totalorder %s138, %s140
      %p147 = scmp.eq.s32.totalorder %s25, 1
      %p148 = por %p146, %p147
      %p149 = scmp.ne.s32.totalorder %s140, %s141
      %p150 = scmp.eq.s32.totalorder %s25, 0
      %p151 = por %p149, %p150
      %p152 = scmp.ne.s32.totalorder %s140, %s141
      %p153 = scmp.eq.s32.totalorder %s26, 1
      %p154 = por %p152, %p153
      %p156 = scmp.ne.s32.totalorder %s141, %s155
      %p157 = scmp.eq.s32.totalorder %s26, 0
      %p158 = por %p156, %p157
      %s160 = sadd.s32 %s159, 1
      %p163 = scmp.eq.s32.totalorder %s20, 1
      %p164 = scmp.ne.s32.totalorder %s159, %s161
      %p165 = scmp.eq.s32.totalorder %s20, 0
      %p166 = por %p164, %p165
      %p167 = scmp.ne.s32.totalorder %s159, %s161
      %p168 = scmp.eq.s32.totalorder %s25, 1
      %p169 = por %p167, %p168
      %p170 = scmp.ne.s32.totalorder %s161, %s162
      %p171 = scmp.eq.s32.totalorder %s25, 0
      %p172 = por %p170, %p171
      %p173 = scmp.ne.s32.totalorder %s161, %s162
      %p174 = scmp.eq.s32.totalorder %s26, 1
      %p175 = por %p173, %p174
      %p177 = scmp.ne.s32.totalorder %s162, %s176
      %p178 = scmp.eq.s32.totalorder %s26, 0
      %p179 = por %p177, %p178
      %s181 = sadd.s32 %s180, 1
      %p184 = scmp.eq.s32.totalorder %s20, 1
      %p185 = scmp.ne.s32.totalorder %s180, %s182
      %p186 = scmp.eq.s32.totalorder %s20, 0
      %p187 = por %p185, %p186
      %p188 = scmp.ne.s32.totalorder %s180, %s182
      %p189 = scmp.eq.s32.totalorder %s25, 1
      %p190 = por %p188, %p189
      %p191 = scmp.ne.s32.totalorder %s182, %s183
      %p192 = scmp.eq.s32.totalorder %s25, 0
      %p193 = por %p191, %p192
      %p194 = scmp.ne.s32.totalorder %s182, %s183
      %p195 = scmp.eq.s32.totalorder %s26, 1
      %p196 = por %p194, %p195
      %p198 = scmp.ne.s32.totalorder %s183, %s197
      %p199 = scmp.eq.s32.totalorder %s26, 0
      %p200 = por %p198, %p199
      %s202 = sadd.s32 %s201, 1
      %p205 = scmp.eq.s32.totalorder %s20, 1
      %p206 = scmp.ne.s32.totalorder %s201, %s203
      %p207 = scmp.eq.s32.totalorder %s20, 0
      %p208 = por %p206, %p207
      %p209 = scmp.ne.s32.totalorder %s201, %s203
      %p210 = scmp.eq.s32.totalorder %s25, 1
      %p211 = por %p209, %p210
      %p212 = scmp.ne.s32.totalorder %s203, %s204
      %p213 = scmp.eq.s32.totalorder %s25, 0
      %p214 = por %p212, %p213
      %p215 = scmp.ne.s32.totalorder %s203, %s204
      %p216 = scmp.eq.s32.totalorder %s26, 1
      %p217 = por %p215, %p216
      %p219 = scmp.ne.s32.totalorder %s204, %s218
      %p220 = scmp.eq.s32.totalorder %s26, 0
      %p221 = por %p219, %p220
      %s223 = sadd.s32 %s222, 1
      %p226 = scmp.eq.s32.totalorder %s20, 1
      %p227 = scmp.ne.s32.totalorder %s222, %s224
      %p228 = scmp.eq.s32.totalorder %s20, 0
      %p229 = por %p227, %p228
      %p230 = scmp.ne.s32.totalorder %s222, %s224
      %p231 = scmp.eq.s32.totalorder %s25, 1
      %p232 = por %p230, %p231
      %p233 = scmp.ne.s32.totalorder %s224, %s225
      %p234 = scmp.eq.s32.totalorder %s25, 0
      %p235 = por %p233, %p234
      %p236 = scmp.ne.s32.totalorder %s224, %s225
      %p237 = scmp.eq.s32.totalorder %s26, 1
      %p238 = por %p236, %p237
      %p240 = scmp.ne.s32.totalorder %s225, %s239
      %p241 = scmp.eq.s32.totalorder %s26, 0
      %p242 = por %p240, %p241
      %s244 = sadd.s32 %s243, 1
      %p247 = scmp.eq.s32.totalorder %s20, 1
      %p248 = scmp.ne.s32.totalorder %s243, %s245
      %p249 = scmp.eq.s32.totalorder %s20, 0
      %p250 = por %p248, %p249
      %p251 = scmp.ne.s32.totalorder %s243, %s245
      %p252 = scmp.eq.s32.totalorder %s25, 1
      %p253 = por %p251, %p252
      %p254 = scmp.ne.s32.totalorder %s245, %s246
      %p255 = scmp.eq.s32.totalorder %s25, 0
      %p256 = por %p254, %p255
      %p257 = scmp.ne.s32.totalorder %s245, %s246
      %p258 = scmp.eq.s32.totalorder %s26, 1
      %p259 = por %p257, %p258
      %p261 = scmp.ne.s32.totalorder %s246, %s260
      %p262 = scmp.eq.s32.totalorder %s26, 0
      %p263 = por %p261, %p262
      %s264 = ssub.s32 %s20, %s27
      %p265 = scmp.eq.s32.totalorder %s264, 0
      %s267 = sadd.s32 %s266, 1
      %s268 = scalar_select %p265, %s266, %s267
      %p271 = pneg %p265
      %p272 = scmp.eq.s32.totalorder %s20, 1
      %p273 = por %p271, %p272
      %p274 = scmp.ne.s32.totalorder %s266, %s269
      %p275 = scmp.eq.s32.totalorder %s20, 0
      %p276 = por %p274, %p275
      %p277 = scmp.ne.s32.totalorder %s266, %s269
      %p278 = scmp.eq.s32.totalorder %s25, 1
      %p279 = por %p277, %p278
      %p280 = scmp.ne.s32.totalorder %s269, %s270
      %p281 = scmp.eq.s32.totalorder %s25, 0
      %p282 = por %p280, %p281
      %p283 = scmp.ne.s32.totalorder %s269, %s270
      %p284 = scmp.eq.s32.totalorder %s26, 1
      %p285 = por %p283, %p284
      %p287 = scmp.ne.s32.totalorder %s270, %s286
      %p288 = scmp.eq.s32.totalorder %s26, 0
      %p289 = por %p287, %p288
      %p290 = scmp.le.s32.totalorder 1, %s20
      %p291 = scmp.lt.s32.totalorder %s20, 3
      %p292 = pnand %p290, %p291
      %p293 = pneg %p292
      // Predicated region
      $region9: #{tpu_custom_call.1} parent=5 // pred_check
        _
      $region10: #{tpu_custom_call.1} parent=5 // pred_check_branch
        %295 = sbr.rel (%p292) target = $region12
      $region11: #{tpu_custom_call.1} parent=5 // pred_region
        %s296 = ssub.s32 %s20, 1
        // Predicated region
        $region13: #{tpu_custom_call.1} parent=11 // pred_check
          %p297 = pneg %p67
        $region14: #{tpu_custom_call.1} parent=11 // pred_check_branch
          %299 = sbr.rel (%p297) target = $region16
        $region15: #{tpu_custom_call.1} parent=11 // pred_region
          _
        $region16: #{tpu_custom_call.1} parent=11 // pred_fallthru
          _
        // Predicated region
        $region17: #{tpu_custom_call.1} parent=11 // pred_check
          %p300 = pneg %p88
        $region18: #{tpu_custom_call.1} parent=11 // pred_check_branch
          %302 = sbr.rel (%p300) target = $region20
        $region19: #{tpu_custom_call.1} parent=11 // pred_region
          _
        $region20: #{tpu_custom_call.1} parent=11 // pred_fallthru
          _
        // Predicated region
        $region21: #{tpu_custom_call.1} parent=11 // pred_check
          %p303 = pneg %p109
        $region22: #{tpu_custom_call.1} parent=11 // pred_check_branch
          %305 = sbr.rel (%p303) target = $region24
        $region23: #{tpu_custom_call.1} parent=11 // pred_region
          _
        $region24: #{tpu_custom_call.1} parent=11 // pred_fallthru
          _
        // Predicated region
        $region25: #{tpu_custom_call.1} parent=11 // pred_check
          %p306 = pneg %p130
        $region26: #{tpu_custom_call.1} parent=11 // pred_check_branch
          %308 = sbr.rel (%p306) target = $region28
        $region27: #{tpu_custom_call.1} parent=11 // pred_region
          _
        $region28: #{tpu_custom_call.1} parent=11 // pred_fallthru
          _
        // Predicated region
        $region29: #{tpu_custom_call.1} parent=11 // pred_check
          %p309 = pneg %p151
        $region30: #{tpu_custom_call.1} parent=11 // pred_check_branch
          %311 = sbr.rel (%p309) target = $region32
        $region31: #{tpu_custom_call.1} parent=11 // pred_region
          _
        $region32: #{tpu_custom_call.1} parent=11 // pred_fallthru
          _
        // Predicated region
        $region33: #{tpu_custom_call.1} parent=11 // pred_check
          %p312 = pneg %p172
        $region34: #{tpu_custom_call.1} parent=11 // pred_check_branch
          %314 = sbr.rel (%p312) target = $region36
        $region35: #{tpu_custom_call.1} parent=11 // pred_region
          _
        $region36: #{tpu_custom_call.1} parent=11 // pred_fallthru
          _
        // Predicated region
        $region37: #{tpu_custom_call.1} parent=11 // pred_check
          %p315 = pneg %p193
        $region38: #{tpu_custom_call.1} parent=11 // pred_check_branch
          %317 = sbr.rel (%p315) target = $region40
        $region39: #{tpu_custom_call.1} parent=11 // pred_region
          _
        $region40: #{tpu_custom_call.1} parent=11 // pred_fallthru
          _
        // Predicated region
        $region41: #{tpu_custom_call.1} parent=11 // pred_check
          %p318 = pneg %p214
        $region42: #{tpu_custom_call.1} parent=11 // pred_check_branch
          %320 = sbr.rel (%p318) target = $region44
        $region43: #{tpu_custom_call.1} parent=11 // pred_region
          _
        $region44: #{tpu_custom_call.1} parent=11 // pred_fallthru
          _
        // Predicated region
        $region45: #{tpu_custom_call.1} parent=11 // pred_check
          %p321 = pneg %p235
        $region46: #{tpu_custom_call.1} parent=11 // pred_check_branch
          %323 = sbr.rel (%p321) target = $region48
        $region47: #{tpu_custom_call.1} parent=11 // pred_region
          _
        $region48: #{tpu_custom_call.1} parent=11 // pred_fallthru
          _
        // Predicated region
        $region49: #{tpu_custom_call.1} parent=11 // pred_check
          %p324 = pneg %p256
        $region50: #{tpu_custom_call.1} parent=11 // pred_check_branch
          %326 = sbr.rel (%p324) target = $region52
        $region51: #{tpu_custom_call.1} parent=11 // pred_region
          _
        $region52: #{tpu_custom_call.1} parent=11 // pred_fallthru
          _
      $region12: #{tpu_custom_call.1} parent=5 // pred_fallthru
        _
      %p327 = scmp.lt.s32.totalorder %s20, 2
      // Predicated region
      $region53: #{tpu_custom_call.1} parent=5 // pred_check
        %p328 = pneg %p327
      $region54: #{tpu_custom_call.1} parent=5 // pred_check_branch
        %330 = sbr.rel (%p328) target = $region56
      $region55: #{tpu_custom_call.1} parent=5 // pred_region
        // Predicated region
        $region57: #{tpu_custom_call.1} parent=55 // pred_check
          %p331 = pneg %p40
        $region58: #{tpu_custom_call.1} parent=55 // pred_check_branch
          %333 = sbr.rel (%p331) target = $region60
        $region59: #{tpu_custom_call.1} parent=55 // pred_region
          %s334 = sand.u32 %s30, 1
          %s335 = sand.u32 %s30, 1
          %s336 = smul.addr %s335, 32
          %s337 = scalar_lea.vmem [#allocation2], %s336
          %s338 = smul.u32 2, %s20
          %s339 = smul.addr %s338, 4
          %s340 = scalar_lea.vmem %s0, %s339
          // Predicated region
          $region61: #{tpu_custom_call.1} parent=59 // pred_check
            _
          $region62: #{tpu_custom_call.1} parent=59 // pred_check_branch
            %342 = sbr.rel (0) target = $region64
          $region63: #{tpu_custom_call.1} parent=59 // pred_region
            // Predicated region
            $region65: #{tpu_custom_call.1} parent=63 // pred_check
              _
            $region66: #{tpu_custom_call.1} parent=63 // pred_check_branch
              %344 = sbr.rel (0) target = $region68
            $region67: #{tpu_custom_call.1} parent=63 // pred_region
              // Predicated region
              $region80: #{tpu_custom_call.1} parent=67 // pred_check
                _
              $region81: #{tpu_custom_call.1} parent=67 // pred_check_branch
                %366 = sbr.rel (0) target = $region83
              $region82: #{tpu_custom_call.1} parent=67 // pred_region
                loop: start=0, step=1, limit=1
                $region84: #{tpu_custom_call.1} parent=82 // loop_pre_header
                  _
                $region85: #{tpu_custom_call.1} parent=82 // loop_header
                  %s368 = sphi 0, %s372
                  %p369 = scmp.ge.s32.totalorder %s368, 1
                  %s373 = sphi %s340, %s340
                  %s374 = sphi %s337, %s337
                $region86: #{tpu_custom_call.1} parent=82 // loop_header_branch
                  %371 = sbr.rel (%p369) target = $region90
                $region87: #{tpu_custom_call.1} parent=82 // loop_body
                  %v375 = vld [vmem:[%s373] sm:$0xff]
                  %376 = vst [vmem:[%s374] sm:$0xff] %v375
                  %v377 = vld [vmem:[%s373 + $0x10] sm:$0xff]
                  %378 = vst [vmem:[%s374 + $0x8] sm:$0xff] %v377
                  %v379 = vld [vmem:[%s373 + $0x20] sm:$0xff]
                  %380 = vst [vmem:[%s374 + $0x10] sm:$0xff] %v379
                  %v381 = vld [vmem:[%s373 + $0x30] sm:$0xff]
                  %382 = vst [vmem:[%s374 + $0x18] sm:$0xff] %v381
                $region88: #{tpu_custom_call.1} parent=82 // loop_footer
                  %s372 = sadd.s32 1, %s368
                $region89: #{tpu_custom_call.1} parent=82 // loop_footer_branch
                  %367 = sbr.rel target = $region85
                $region90: #{tpu_custom_call.1} parent=82 // loop_exit
                  _
              $region83: #{tpu_custom_call.1} parent=67 // pred_fallthru
                _
              // Predicated region
              $region91: #{tpu_custom_call.1} parent=67 // pred_check
                _
              $region92: #{tpu_custom_call.1} parent=67 // pred_check_branch
                %384 = sbr.rel target = $region94
              $region93: #{tpu_custom_call.1} parent=67 // pred_region
                _
              $region94: #{tpu_custom_call.1} parent=67 // pred_fallthru
                _
            $region68: #{tpu_custom_call.1} parent=63 // pred_fallthru
              _
            // Predicated region
            $region69: #{tpu_custom_call.1} parent=63 // pred_check
              _
            $region70: #{tpu_custom_call.1} parent=63 // pred_check_branch
              %346 = sbr.rel target = $region72
            $region71: #{tpu_custom_call.1} parent=63 // pred_region
              %s348 = ssub.s32 256, 1
              loop: start=0, step=1, limit=1
              $region73: #{tpu_custom_call.1} parent=71 // loop_pre_header
                _
              $region74: #{tpu_custom_call.1} parent=71 // loop_header
                %s350 = sphi 0, %s354
                %p351 = scmp.ge.s32.totalorder %s350, 1
                %s355 = sphi %s340, %s340
                %s356 = sphi %s337, %s337
              $region75: #{tpu_custom_call.1} parent=71 // loop_header_branch
                %353 = sbr.rel (%p351) target = $region79
              $region76: #{tpu_custom_call.1} parent=71 // loop_body
                %v357 = vld [vmem:[%s355] sm:%s348]
                %358 = vst [vmem:[%s356] sm:%s348] %v357
                %v359 = vld [vmem:[%s355 + $0x10] sm:%s348]
                %360 = vst [vmem:[%s356 + $0x8] sm:%s348] %v359
                %v361 = vld [vmem:[%s355 + $0x20] sm:%s348]
                %362 = vst [vmem:[%s356 + $0x10] sm:%s348] %v361
                %v363 = vld [vmem:[%s355 + $0x30] sm:%s348]
                %364 = vst [vmem:[%s356 + $0x18] sm:%s348] %v363
              $region77: #{tpu_custom_call.1} parent=71 // loop_footer
                %s354 = sadd.s32 1, %s350
              $region78: #{tpu_custom_call.1} parent=71 // loop_footer_branch
                %349 = sbr.rel target = $region74
              $region79: #{tpu_custom_call.1} parent=71 // loop_exit
                _
            $region72: #{tpu_custom_call.1} parent=63 // pred_fallthru
              _
          $region64: #{tpu_custom_call.1} parent=59 // pred_fallthru
            _
          %385 = vnop
        $region60: #{tpu_custom_call.1} parent=55 // pred_fallthru
          _
      $region56: #{tpu_custom_call.1} parent=5 // pred_fallthru
        _
      %p386 = scmp.le.s32.totalorder 1, %s20
      %p387 = scmp.lt.s32.totalorder %s20, 3
      %p388 = pnand %p386, %p387
      %p389 = pneg %p388
      // Predicated region
      $region95: #{tpu_custom_call.1} parent=5 // pred_check
        _
      $region96: #{tpu_custom_call.1} parent=5 // pred_check_branch
        %391 = sbr.rel (%p388) target = $region98
      $region97: #{tpu_custom_call.1} parent=5 // pred_region
        %s392 = ssub.s32 %s20, 1
        %s393 = sand.u32 %s33, 1
        %s394 = sand.u32 %s33, 1
        %s395 = smul.addr %s394, 32
        %s396 = scalar_lea.vmem [#allocation2], %s395
        // Predicated region
        $region99: #{tpu_custom_call.1} parent=97 // pred_check
          %p397 = pneg %p46
        $region100: #{tpu_custom_call.1} parent=97 // pred_check_branch
          %399 = sbr.rel (%p397) target = $region102
        $region101: #{tpu_custom_call.1} parent=97 // pred_region
          _
        $region102: #{tpu_custom_call.1} parent=97 // pred_fallthru
          _
        %s400 = sand.u32 %s33, 1
        %s401 = sand.u32 %s33, 1
        %s402 = smul.addr %s401, 32
        %s403 = scalar_lea.vmem [#allocation2], %s402
        %p404 = pneg %p46
        %p405 = pneg %p43
        %p406 = pneg %p67
        %p407 = pneg %p64
        %p408 = pneg %p88
        %p409 = pneg %p85
        %p410 = pneg %p109
        %p411 = pneg %p106
        %p412 = pneg %p130
        %p413 = pneg %p127
        %p414 = pneg %p151
        %p415 = pneg %p148
        %p416 = pneg %p172
        %p417 = pneg %p169
        %p418 = pneg %p193
        %p419 = pneg %p190
        %p420 = pneg %p214
        %p421 = pneg %p211
        %p422 = pneg %p235
        %p423 = pneg %p232
        %p424 = pneg %p256
        %p425 = pneg %p253
        %p426 = pneg %p282
        %p427 = pneg %p279
        %s428 = sand.u32 %s269, 1
        %s429 = scalar_lea.sflag [#allocation4], %s428
        %s430 = sand.u32 %s269, 1
        %s431 = smul.addr %s430, 64
        %s432 = scalar_lea.vmem [#allocation3], %s431
        %s433 = smul.u32 2, %s25
        %s434 = smul.u32 2, %s25
        %v436 = vld [vmem:[%s396] sm:$0xff]
        %v437 = vld [vmem:[%s396 + $0x8] sm:$0xff]
        %v438 = vld [vmem:[%s396 + $0x10] sm:$0xff]
        %v439 = vld [vmem:[%s396 + $0x18] sm:$0xff]
        %v440 = vld [vmem:[%s1] sm:$0xf]
        %v441 = vld [vmem:[%s1 + $0x4] sm:$0xf]
        %v442 = vld [vmem:[%s1 + $0x8] sm:$0xf]
        %v443 = vld [vmem:[%s1 + $0xc] sm:$0xf]
        %v444 = vld [vmem:[%s1 + $0x10] sm:$0xf]
        %v445 = vld [vmem:[%s1 + $0x14] sm:$0xf]
        %v446 = vld [vmem:[%s1 + $0x18] sm:$0xf]
        %v447 = vld [vmem:[%s1 + $0x1c] sm:$0xf]
        %v448 = vld [vmem:[%s2] sm:$0xff]
        %v449 = vld [vmem:[%s2 + $0x8] sm:$0xff]
        %v450 = vld [vmem:[%s2 + $0x10] sm:$0xff]
        %v451 = vld [vmem:[%s2 + $0x18] sm:$0xff]
        %v452 = vld [vmem:[%s2 + $0x20] sm:$0xff]
        %v453 = vld [vmem:[%s2 + $0x28] sm:$0xff]
        %v454 = vld [vmem:[%s2 + $0x30] sm:$0xff]
        %v455 = vld [vmem:[%s2 + $0x38] sm:$0xff]
        %457 = vset.pattern.permute.xlu0 0
        %458 = vperm.xlu0 %457, %v448
        %v459 = vpop.permute.xlu0 %458
        %462 = vset.pattern.permute.xlu0 0
        %463 = vperm.xlu0 %462, %v449
        %v464 = vpop.permute.xlu0 %463
        %467 = vset.pattern.permute.xlu0 0
        %468 = vperm.xlu0 %467, %v450
        %v469 = vpop.permute.xlu0 %468
        %472 = vset.pattern.permute.xlu0 0
        %473 = vperm.xlu0 %472, %v451
        %v474 = vpop.permute.xlu0 %473
        %477 = vset.pattern.permute.xlu0 0
        %478 = vperm.xlu0 %477, %v452
        %v479 = vpop.permute.xlu0 %478
        %482 = vset.pattern.permute.xlu0 0
        %483 = vperm.xlu0 %482, %v453
        %v484 = vpop.permute.xlu0 %483
        %487 = vset.pattern.permute.xlu0 0
        %488 = vperm.xlu0 %487, %v454
        %v489 = vpop.permute.xlu0 %488
        %492 = vset.pattern.permute.xlu0 0
        %493 = vperm.xlu0 %492, %v455
        %v494 = vpop.permute.xlu0 %493
        %v504 = vunpack.c.l.b16 %v440
        %v505 = vunpack.c.l.b16 %v441
        %v506 = vunpack.c.l.b16 %v442
        %v507 = vunpack.c.l.b16 %v443
        %v508 = vunpack.c.l.b16 %v444
        %v509 = vunpack.c.l.b16 %v445
        %v510 = vunpack.c.l.b16 %v446
        %v511 = vunpack.c.l.b16 %v447
        %v512 = vpack.c.b16 %v505, %v504
        %v513 = vpack.c.b16 %v507, %v506
        %v514 = vpack.c.b16 %v509, %v508
        %v515 = vpack.c.b16 %v511, %v510
        %v520 = vunpack.c.l.b16 %v436
        %v521 = vunpack.c.h.b16 %v436
        %v522 = vunpack.c.l.b16 %v437
        %v523 = vunpack.c.h.b16 %v437
        %v524 = vunpack.c.l.b16 %v438
        %v525 = vunpack.c.h.b16 %v438
        %v526 = vunpack.c.l.b16 %v439
        %v527 = vunpack.c.h.b16 %v439
        %v528 = vpack.c.b16 %v522, %v520
        %v529 = vpack.c.b16 %v523, %v521
        %v530 = vpack.c.b16 %v526, %v524
        %v531 = vpack.c.b16 %v527, %v525
        %vm536 = vcmask 261120
        %v538 = vsel %vm536, %v512, 0
        %v541 = vsel %vm536, %v513, 0
        %v544 = vsel %vm536, %v514, 0
        %v547 = vsel %vm536, %v515, 0
        %549 = vmatprep.subr.bf16.mxu0 0
        %550 = vmatpush1.bf16.msra.mxu0 0
        %551 = vmatprep.subr.bf16.mxu0 0
        %552 = vmatpush1.bf16.msra.mxu0 0
        %553 = vmatprep.subr.bf16.mxu0 0
        %554 = vmatpush1.bf16.msra.mxu0 0
        %555 = vmatprep.subr.bf16.mxu0 0
        %556 = vmatpush1.bf16.msra.mxu0 0
        %557 = vmatprep.subr.bf16.mxu0 0
        %558 = vmatpush1.bf16.msra.mxu0 0
        %559 = vmatprep.subr.bf16.mxu0 0
        %560 = vmatpush1.bf16.msra.mxu0 0
        %561 = vmatprep.subr.bf16.mxu0 %v531
        %562 = vmatpush1.bf16.msra.mxu0 %v530
        %563 = vmatprep.subr.bf16.mxu0 %v529
        %564 = vmatpush1.bf16.msra.mxu0 %v528
        %565 = vmatprep.subr.bf16.mxu0 0
        %566 = vmatpush2.bf16.msra.mxu0 0
        %567 = vmatprep.subr.bf16.mxu0 0
        %568 = vmatpush2.bf16.msra.mxu0 0
        %569 = vmatprep.subr.bf16.mxu0 0
        %570 = vmatpush2.bf16.msra.mxu0 0
        %571 = vmatprep.subr.bf16.mxu0 0
        %572 = vmatpush2.bf16.msra.mxu0 0
        %573 = vmatprep.subr.bf16.mxu0 0
        %574 = vmatpush2.bf16.msra.mxu0 0
        %575 = vmatprep.subr.bf16.mxu0 0
        %576 = vmatpush2.bf16.msra.mxu0 0
        %577 = vmatprep.subr.bf16.mxu0 0
        %578 = vmatpush2.bf16.msra.mxu0 0
        %579 = vmatprep.subr.bf16.mxu0 0
        %580 = vmatpush2.bf16.msra.mxu0 0
        %581 = vmatprep.mubr.bf16.mxu0 0
        %582 = vmatmul.mubr.bf16.gmra.mxu0 %v538
        %v583 = vpop.f32.mrf.mxu0
        %v584 = vadd.f32 %v459, %v583
        %v585 = vpop.f32.mrf.mxu0
        %v586 = vadd.f32 %v459, %v585
        %v587 = vpop.f32.mrf.mxu0
        %v588 = vadd.f32 %v464, %v587
        %v589 = vpop.f32.mrf.mxu0
        %v590 = vadd.f32 %v464, %v589
        %591 = vmatprep.mubr.bf16.mxu0 0
        %592 = vmatmul.mubr.bf16.gmra.mxu0 %v541
        %v593 = vpop.f32.mrf.mxu0
        %v594 = vadd.f32 %v469, %v593
        %v595 = vpop.f32.mrf.mxu0
        %v596 = vadd.f32 %v469, %v595
        %v597 = vpop.f32.mrf.mxu0
        %v598 = vadd.f32 %v474, %v597
        %v599 = vpop.f32.mrf.mxu0
        %v600 = vadd.f32 %v474, %v599
        %601 = vmatprep.mubr.bf16.mxu0 0
        %602 = vmatmul.mubr.bf16.gmra.mxu0 %v544
        %v603 = vpop.f32.mrf.mxu0
        %v604 = vadd.f32 %v479, %v603
        %v605 = vpop.f32.mrf.mxu0
        %v606 = vadd.f32 %v479, %v605
        %v607 = vpop.f32.mrf.mxu0
        %v608 = vadd.f32 %v484, %v607
        %v609 = vpop.f32.mrf.mxu0
        %v610 = vadd.f32 %v484, %v609
        %611 = vmatprep.mubr.bf16.mxu0 0
        %612 = vmatmul.mubr.bf16.gmra.mxu0 %v547
        %v613 = vpop.f32.mrf.mxu0
        %v614 = vadd.f32 %v489, %v613
        %v615 = vpop.f32.mrf.mxu0
        %v616 = vadd.f32 %v489, %v615
        %v617 = vpop.f32.mrf.mxu0
        %v618 = vadd.f32 %v494, %v617
        %v619 = vpop.f32.mrf.mxu0
        %v620 = vadd.f32 %v494, %v619
        %621 = vdwg.mxu0
        %vm622 = vcmp.gt.f32.partialorder %v584, 0.0
        %vm623 = vcmp.gt.f32.partialorder %v586, 0.0
        %vm624 = vcmp.gt.f32.partialorder %v588, 0.0
        %vm625 = vcmp.gt.f32.partialorder %v590, 0.0
        %vm626 = vcmp.gt.f32.partialorder %v594, 0.0
        %vm627 = vcmp.gt.f32.partialorder %v596, 0.0
        %vm628 = vcmp.gt.f32.partialorder %v598, 0.0
        %vm629 = vcmp.gt.f32.partialorder %v600, 0.0
        %vm630 = vcmp.gt.f32.partialorder %v604, 0.0
        %vm631 = vcmp.gt.f32.partialorder %v606, 0.0
        %vm632 = vcmp.gt.f32.partialorder %v608, 0.0
        %vm633 = vcmp.gt.f32.partialorder %v610, 0.0
        %vm634 = vcmp.gt.f32.partialorder %v614, 0.0
        %vm635 = vcmp.gt.f32.partialorder %v616, 0.0
        %vm636 = vcmp.gt.f32.partialorder %v618, 0.0
        %vm637 = vcmp.gt.f32.partialorder %v620, 0.0
        %v638 = vmul.f32 %v584, 0.2
        %v639 = vmul.f32 %v586, 0.2
        %v640 = vmul.f32 %v588, 0.2
        %v641 = vmul.f32 %v590, 0.2
        %v642 = vmul.f32 %v594, 0.2
        %v643 = vmul.f32 %v596, 0.2
        %v644 = vmul.f32 %v598, 0.2
        %v645 = vmul.f32 %v600, 0.2
        %v646 = vmul.f32 %v604, 0.2
        %v647 = vmul.f32 %v606, 0.2
        %v648 = vmul.f32 %v608, 0.2
        %v649 = vmul.f32 %v610, 0.2
        %v650 = vmul.f32 %v614, 0.2
        %v651 = vmul.f32 %v616, 0.2
        %v652 = vmul.f32 %v618, 0.2
        %v653 = vmul.f32 %v620, 0.2
        %v654 = vsel %vm622, %v584, %v638
        %v655 = vsel %vm623, %v586, %v639
        %v656 = vsel %vm624, %v588, %v640
        %v657 = vsel %vm625, %v590, %v641
        %v658 = vsel %vm626, %v594, %v642
        %v659 = vsel %vm627, %v596, %v643
        %v660 = vsel %vm628, %v598, %v644
        %v661 = vsel %vm629, %v600, %v645
        %v662 = vsel %vm630, %v604, %v646
        %v663 = vsel %vm631, %v606, %v647
        %v664 = vsel %vm632, %v608, %v648
        %v665 = vsel %vm633, %v610, %v649
        %v666 = vsel %vm634, %v614, %v650
        %v667 = vsel %vm635, %v616, %v651
        %v668 = vsel %vm636, %v618, %v652
        %v669 = vsel %vm637, %v620, %v653
        %v670 = vpack.c.bf16 %v656, %v654
        %v671 = vpack.c.bf16 %v657, %v655
        %v672 = vpack.c.bf16 %v660, %v658
        %v673 = vpack.c.bf16 %v661, %v659
        %v674 = vpack.c.bf16 %v664, %v662
        %v675 = vpack.c.bf16 %v665, %v663
        %v676 = vpack.c.bf16 %v668, %v666
        %v677 = vpack.c.bf16 %v669, %v667
        %v678 = vld [vmem:[%s3] sm:$0xf]
        %v679 = vld [vmem:[%s3 + $0x4] sm:$0xf]
        %v680 = vld [vmem:[%s3 + $0x8] sm:$0xf]
        %v681 = vld [vmem:[%s3 + $0xc] sm:$0xf]
        %v682 = vld [vmem:[%s4] sm:$0xff]
        %v683 = vld [vmem:[%s4 + $0x8] sm:$0xff]
        %v684 = vld [vmem:[%s4 + $0x10] sm:$0xff]
        %v685 = vld [vmem:[%s4 + $0x18] sm:$0xff]
        %687 = vset.pattern.permute.xlu0 0
        %688 = vperm.xlu0 %687, %v682
        %v689 = vpop.permute.xlu0 %688
        %692 = vset.pattern.permute.xlu0 0
        %693 = vperm.xlu0 %692, %v683
        %v694 = vpop.permute.xlu0 %693
        %697 = vset.pattern.permute.xlu0 0
        %698 = vperm.xlu0 %697, %v684
        %v699 = vpop.permute.xlu0 %698
        %702 = vset.pattern.permute.xlu0 0
        %703 = vperm.xlu0 %702, %v685
        %v704 = vpop.permute.xlu0 %703
        %v710 = vunpack.c.l.b16 %v678
        %v711 = vunpack.c.l.b16 %v679
        %v712 = vunpack.c.l.b16 %v680
        %v713 = vunpack.c.l.b16 %v681
        %v714 = vpack.c.b16 %v711, %v710
        %v715 = vpack.c.b16 %v713, %v712
        %vm716 = vcmask 523264
        %v718 = vsel %vm716, %v714, 0
        %v721 = vsel %vm716, %v715, 0
        %723 = vmatprep.subr.bf16.mxu0 0
        %724 = vmatpush1.bf16.msra.mxu0 0
        %725 = vmatprep.subr.bf16.mxu0 0
        %726 = vmatpush1.bf16.msra.mxu0 0
        %727 = vmatprep.subr.bf16.mxu0 0
        %728 = vmatpush1.bf16.msra.mxu0 0
        %729 = vmatprep.subr.bf16.mxu0 0
        %730 = vmatpush1.bf16.msra.mxu0 0
        %731 = vmatprep.subr.bf16.mxu0 %v677
        %732 = vmatpush1.bf16.msra.mxu0 %v676
        %733 = vmatprep.subr.bf16.mxu0 %v675
        %734 = vmatpush1.bf16.msra.mxu0 %v674
        %735 = vmatprep.subr.bf16.mxu0 %v673
        %736 = vmatpush1.bf16.msra.mxu0 %v672
        %737 = vmatprep.subr.bf16.mxu0 %v671
        %738 = vmatpush1.bf16.msra.mxu0 %v670
        %739 = vmatprep.subr.bf16.mxu0 0
        %740 = vmatpush2.bf16.msra.mxu0 0
        %741 = vmatprep.subr.bf16.mxu0 0
        %742 = vmatpush2.bf16.msra.mxu0 0
        %743 = vmatprep.subr.bf16.mxu0 0
        %744 = vmatpush2.bf16.msra.mxu0 0
        %745 = vmatprep.subr.bf16.mxu0 0
        %746 = vmatpush2.bf16.msra.mxu0 0
        %747 = vmatprep.subr.bf16.mxu0 0
        %748 = vmatpush2.bf16.msra.mxu0 0
        %749 = vmatprep.subr.bf16.mxu0 0
        %750 = vmatpush2.bf16.msra.mxu0 0
        %751 = vmatprep.subr.bf16.mxu0 0
        %752 = vmatpush2.bf16.msra.mxu0 0
        %753 = vmatprep.subr.bf16.mxu0 0
        %754 = vmatpush2.bf16.msra.mxu0 0
        %755 = vmatprep.mubr.bf16.mxu0 0
        %756 = vmatmul.mubr.bf16.gmra.mxu0 %v718
        %v757 = vpop.f32.mrf.mxu0
        %v758 = vadd.f32 %v689, %v757
        %v759 = vpop.f32.mrf.mxu0
        %v760 = vadd.f32 %v689, %v759
        %v761 = vpop.f32.mrf.mxu0
        %v762 = vadd.f32 %v694, %v761
        %v763 = vpop.f32.mrf.mxu0
        %v764 = vadd.f32 %v694, %v763
        %765 = vmatprep.mubr.bf16.mxu0 0
        %766 = vmatmul.mubr.bf16.gmra.mxu0 %v721
        %v767 = vpop.f32.mrf.mxu0
        %v768 = vadd.f32 %v699, %v767
        %v769 = vpop.f32.mrf.mxu0
        %v770 = vadd.f32 %v699, %v769
        %v771 = vpop.f32.mrf.mxu0
        %v772 = vadd.f32 %v704, %v771
        %v773 = vpop.f32.mrf.mxu0
        %v774 = vadd.f32 %v704, %v773
        %775 = vdwg.mxu0
        %vm776 = vcmp.gt.f32.partialorder %v758, 0.0
        %vm777 = vcmp.gt.f32.partialorder %v760, 0.0
        %vm778 = vcmp.gt.f32.partialorder %v762, 0.0
        %vm779 = vcmp.gt.f32.partialorder %v764, 0.0
        %vm780 = vcmp.gt.f32.partialorder %v768, 0.0
        %vm781 = vcmp.gt.f32.partialorder %v770, 0.0
        %vm782 = vcmp.gt.f32.partialorder %v772, 0.0
        %vm783 = vcmp.gt.f32.partialorder %v774, 0.0
        %v784 = vmul.f32 %v758, 0.2
        %v785 = vmul.f32 %v760, 0.2
        %v786 = vmul.f32 %v762, 0.2
        %v787 = vmul.f32 %v764, 0.2
        %v788 = vmul.f32 %v768, 0.2
        %v789 = vmul.f32 %v770, 0.2
        %v790 = vmul.f32 %v772, 0.2
        %v791 = vmul.f32 %v774, 0.2
        %v792 = vsel %vm776, %v758, %v784
        %v793 = vsel %vm777, %v760, %v785
        %v794 = vsel %vm778, %v762, %v786
        %v795 = vsel %vm779, %v764, %v787
        %v796 = vsel %vm780, %v768, %v788
        %v797 = vsel %vm781, %v770, %v789
        %v798 = vsel %vm782, %v772, %v790
        %v799 = vsel %vm783, %v774, %v791
        %v800 = vpack.c.bf16 %v794, %v792
        %v801 = vpack.c.bf16 %v795, %v793
        %v802 = vpack.c.bf16 %v798, %v796
        %v803 = vpack.c.bf16 %v799, %v797
        %v804 = vld [vmem:[%s5] sm:$0xf]
        %v805 = vld [vmem:[%s5 + $0x4] sm:$0xf]
        %v806 = vld [vmem:[%s6] sm:$0xff]
        %v807 = vld [vmem:[%s6 + $0x8] sm:$0xff]
        %809 = vset.pattern.permute.xlu0 0
        %810 = vperm.xlu0 %809, %v806
        %v811 = vpop.permute.xlu0 %810
        %814 = vset.pattern.permute.xlu0 0
        %815 = vperm.xlu0 %814, %v807
        %v816 = vpop.permute.xlu0 %815
        %v820 = vunpack.c.l.b16 %v804
        %v821 = vunpack.c.l.b16 %v805
        %v822 = vpack.c.b16 %v821, %v820
        %v824 = vsel %vm536, %v822, 0
        %826 = vmatprep.subr.bf16.mxu0 0
        %827 = vmatpush1.bf16.msra.mxu0 0
        %828 = vmatprep.subr.bf16.mxu0 0
        %829 = vmatpush1.bf16.msra.mxu0 0
        %830 = vmatprep.subr.bf16.mxu0 0
        %831 = vmatpush1.bf16.msra.mxu0 0
        %832 = vmatprep.subr.bf16.mxu0 0
        %833 = vmatpush1.bf16.msra.mxu0 0
        %834 = vmatprep.subr.bf16.mxu0 0
        %835 = vmatpush1.bf16.msra.mxu0 0
        %836 = vmatprep.subr.bf16.mxu0 0
        %837 = vmatpush1.bf16.msra.mxu0 0
        %838 = vmatprep.subr.bf16.mxu0 %v803
        %839 = vmatpush1.bf16.msra.mxu0 %v802
        %840 = vmatprep.subr.bf16.mxu0 %v801
        %841 = vmatpush1.bf16.msra.mxu0 %v800
        %842 = vmatprep.subr.bf16.mxu0 0
        %843 = vmatpush2.bf16.msra.mxu0 0
        %844 = vmatprep.subr.bf16.mxu0 0
        %845 = vmatpush2.bf16.msra.mxu0 0
        %846 = vmatprep.subr.bf16.mxu0 0
        %847 = vmatpush2.bf16.msra.mxu0 0
        %848 = vmatprep.subr.bf16.mxu0 0
        %849 = vmatpush2.bf16.msra.mxu0 0
        %850 = vmatprep.subr.bf16.mxu0 0
        %851 = vmatpush2.bf16.msra.mxu0 0
        %852 = vmatprep.subr.bf16.mxu0 0
        %853 = vmatpush2.bf16.msra.mxu0 0
        %854 = vmatprep.subr.bf16.mxu0 0
        %855 = vmatpush2.bf16.msra.mxu0 0
        %856 = vmatprep.subr.bf16.mxu0 0
        %857 = vmatpush2.bf16.msra.mxu0 0
        %858 = vmatprep.mubr.bf16.mxu0 0
        %859 = vmatmul.mubr.bf16.gmra.mxu0 %v824
        %v860 = vpop.f32.mrf.mxu0
        %v861 = vadd.f32 %v811, %v860
        %v862 = vpop.f32.mrf.mxu0
        %v863 = vadd.f32 %v811, %v862
        %v864 = vpop.f32.mrf.mxu0
        %v865 = vadd.f32 %v816, %v864
        %v866 = vpop.f32.mrf.mxu0
        %v867 = vadd.f32 %v816, %v866
        %868 = vdwg.mxu0
        %vm869 = vcmp.gt.f32.partialorder %v861, 0.0
        %vm870 = vcmp.gt.f32.partialorder %v863, 0.0
        %vm871 = vcmp.gt.f32.partialorder %v865, 0.0
        %vm872 = vcmp.gt.f32.partialorder %v867, 0.0
        %v873 = vmul.f32 %v861, 0.2
        %v874 = vmul.f32 %v863, 0.2
        %v875 = vmul.f32 %v865, 0.2
        %v876 = vmul.f32 %v867, 0.2
        %v877 = vsel %vm869, %v861, %v873
        %v878 = vsel %vm870, %v863, %v874
        %v879 = vsel %vm871, %v865, %v875
        %v880 = vsel %vm872, %v867, %v876
        %v881 = vpack.c.bf16 %v879, %v877
        %v882 = vpack.c.bf16 %v880, %v878
        %v883 = vld [vmem:[%s7] sm:$0xf]
        %v884 = vld [vmem:[%s7 + $0x4] sm:$0xf]
        %v885 = vld [vmem:[%s7 + $0x8] sm:$0xf]
        %v886 = vld [vmem:[%s7 + $0xc] sm:$0xf]
        %v887 = vld [vmem:[%s8] sm:$0xff]
        %v888 = vld [vmem:[%s8 + $0x8] sm:$0xff]
        %v889 = vld [vmem:[%s8 + $0x10] sm:$0xff]
        %v890 = vld [vmem:[%s8 + $0x18] sm:$0xff]
        %892 = vset.pattern.permute.xlu0 0
        %893 = vperm.xlu0 %892, %v887
        %v894 = vpop.permute.xlu0 %893
        %897 = vset.pattern.permute.xlu0 0
        %898 = vperm.xlu0 %897, %v888
        %v899 = vpop.permute.xlu0 %898
        %902 = vset.pattern.permute.xlu0 0
        %903 = vperm.xlu0 %902, %v889
        %v904 = vpop.permute.xlu0 %903
        %907 = vset.pattern.permute.xlu0 0
        %908 = vperm.xlu0 %907, %v890
        %v909 = vpop.permute.xlu0 %908
        %v915 = vunpack.c.l.b16 %v883
        %v916 = vunpack.c.l.b16 %v884
        %v917 = vunpack.c.l.b16 %v885
        %v918 = vunpack.c.l.b16 %v886
        %v919 = vpack.c.b16 %v916, %v915
        %v920 = vpack.c.b16 %v918, %v917
        %vm921 = vcmask 130048
        %v923 = vsel %vm921, %v919, 0
        %v926 = vsel %vm921, %v920, 0
        %928 = vmatprep.subr.bf16.mxu0 0
        %929 = vmatpush1.bf16.msra.mxu0 0
        %930 = vmatprep.subr.bf16.mxu0 0
        %931 = vmatpush1.bf16.msra.mxu0 0
        %932 = vmatprep.subr.bf16.mxu0 0
        %933 = vmatpush1.bf16.msra.mxu0 0
        %934 = vmatprep.subr.bf16.mxu0 0
        %935 = vmatpush1.bf16.msra.mxu0 0
        %936 = vmatprep.subr.bf16.mxu0 0
        %937 = vmatpush1.bf16.msra.mxu0 0
        %938 = vmatprep.subr.bf16.mxu0 0
        %939 = vmatpush1.bf16.msra.mxu0 0
        %940 = vmatprep.subr.bf16.mxu0 0
        %941 = vmatpush1.bf16.msra.mxu0 0
        %942 = vmatprep.subr.bf16.mxu0 %v882
        %943 = vmatpush1.bf16.msra.mxu0 %v881
        %944 = vmatprep.subr.bf16.mxu0 0
        %945 = vmatpush2.bf16.msra.mxu0 0
        %946 = vmatprep.subr.bf16.mxu0 0
        %947 = vmatpush2.bf16.msra.mxu0 0
        %948 = vmatprep.subr.bf16.mxu0 0
        %949 = vmatpush2.bf16.msra.mxu0 0
        %950 = vmatprep.subr.bf16.mxu0 0
        %951 = vmatpush2.bf16.msra.mxu0 0
        %952 = vmatprep.subr.bf16.mxu0 0
        %953 = vmatpush2.bf16.msra.mxu0 0
        %954 = vmatprep.subr.bf16.mxu0 0
        %955 = vmatpush2.bf16.msra.mxu0 0
        %956 = vmatprep.subr.bf16.mxu0 0
        %957 = vmatpush2.bf16.msra.mxu0 0
        %958 = vmatprep.subr.bf16.mxu0 0
        %959 = vmatpush2.bf16.msra.mxu0 0
        %960 = vmatprep.mubr.bf16.mxu0 0
        %961 = vmatmul.mubr.bf16.gmra.mxu0 %v923
        %v962 = vpop.f32.mrf.mxu0
        %v963 = vadd.f32 %v894, %v962
        %v964 = vpop.f32.mrf.mxu0
        %v965 = vadd.f32 %v894, %v964
        %v966 = vpop.f32.mrf.mxu0
        %v967 = vadd.f32 %v899, %v966
        %v968 = vpop.f32.mrf.mxu0
        %v969 = vadd.f32 %v899, %v968
        %970 = vmatprep.mubr.bf16.mxu0 0
        %971 = vmatmul.mubr.bf16.gmra.mxu0 %v926
        %v972 = vpop.f32.mrf.mxu0
        %v973 = vadd.f32 %v904, %v972
        %v974 = vpop.f32.mrf.mxu0
        %v975 = vadd.f32 %v904, %v974
        %v976 = vpop.f32.mrf.mxu0
        %v977 = vadd.f32 %v909, %v976
        %v978 = vpop.f32.mrf.mxu0
        %v979 = vadd.f32 %v909, %v978
        %980 = vdwg.mxu0
        %vm981 = vcmp.gt.f32.partialorder %v963, 0.0
        %vm982 = vcmp.gt.f32.partialorder %v965, 0.0
        %vm983 = vcmp.gt.f32.partialorder %v967, 0.0
        %vm984 = vcmp.gt.f32.partialorder %v969, 0.0
        %vm985 = vcmp.gt.f32.partialorder %v973, 0.0
        %vm986 = vcmp.gt.f32.partialorder %v975, 0.0
        %vm987 = vcmp.gt.f32.partialorder %v977, 0.0
        %vm988 = vcmp.gt.f32.partialorder %v979, 0.0
        %v989 = vmul.f32 %v963, 0.2
        %v990 = vmul.f32 %v965, 0.2
        %v991 = vmul.f32 %v967, 0.2
        %v992 = vmul.f32 %v969, 0.2
        %v993 = vmul.f32 %v973, 0.2
        %v994 = vmul.f32 %v975, 0.2
        %v995 = vmul.f32 %v977, 0.2
        %v996 = vmul.f32 %v979, 0.2
        %v997 = vsel %vm981, %v963, %v989
        %v998 = vsel %vm982, %v965, %v990
        %v999 = vsel %vm983, %v967, %v991
        %v1000 = vsel %vm984, %v969, %v992
        %v1001 = vsel %vm985, %v973, %v993
        %v1002 = vsel %vm986, %v975, %v994
        %v1003 = vsel %vm987, %v977, %v995
        %v1004 = vsel %vm988, %v979, %v996
        %v1005 = vpack.c.bf16 %v999, %v997
        %v1006 = vpack.c.bf16 %v1000, %v998
        %v1007 = vpack.c.bf16 %v1003, %v1001
        %v1008 = vpack.c.bf16 %v1004, %v1002
        %v1009 = vld [vmem:[%s9] sm:$0xf]
        %v1010 = vld [vmem:[%s9 + $0x4] sm:$0xf]
        %v1011 = vld [vmem:[%s9 + $0x8] sm:$0xf]
        %v1012 = vld [vmem:[%s9 + $0xc] sm:$0xf]
        %v1013 = vld [vmem:[%s10] sm:$0xff]
        %v1014 = vld [vmem:[%s10 + $0x8] sm:$0xff]
        %v1015 = vld [vmem:[%s10 + $0x10] sm:$0xff]
        %v1016 = vld [vmem:[%s10 + $0x18] sm:$0xff]
        %1018 = vset.pattern.permute.xlu0 0
        %1019 = vperm.xlu0 %1018, %v1013
        %v1020 = vpop.permute.xlu0 %1019
        %1023 = vset.pattern.permute.xlu0 0
        %1024 = vperm.xlu0 %1023, %v1014
        %v1025 = vpop.permute.xlu0 %1024
        %1028 = vset.pattern.permute.xlu0 0
        %1029 = vperm.xlu0 %1028, %v1015
        %v1030 = vpop.permute.xlu0 %1029
        %1033 = vset.pattern.permute.xlu0 0
        %1034 = vperm.xlu0 %1033, %v1016
        %v1035 = vpop.permute.xlu0 %1034
        %v1041 = vunpack.c.l.b16 %v1009
        %v1042 = vunpack.c.l.b16 %v1010
        %v1043 = vunpack.c.l.b16 %v1011
        %v1044 = vunpack.c.l.b16 %v1012
        %v1045 = vpack.c.b16 %v1042, %v1041
        %v1046 = vpack.c.b16 %v1044, %v1043
        %v1048 = vsel %vm536, %v1045, 0
        %v1051 = vsel %vm536, %v1046, 0
        %1053 = vmatprep.subr.bf16.mxu0 0
        %1054 = vmatpush1.bf16.msra.mxu0 0
        %1055 = vmatprep.subr.bf16.mxu0 0
        %1056 = vmatpush1.bf16.msra.mxu0 0
        %1057 = vmatprep.subr.bf16.mxu0 0
        %1058 = vmatpush1.bf16.msra.mxu0 0
        %1059 = vmatprep.subr.bf16.mxu0 0
        %1060 = vmatpush1.bf16.msra.mxu0 0
        %1061 = vmatprep.subr.bf16.mxu0 0
        %1062 = vmatpush1.bf16.msra.mxu0 0
        %1063 = vmatprep.subr.bf16.mxu0 0
        %1064 = vmatpush1.bf16.msra.mxu0 0
        %1065 = vmatprep.subr.bf16.mxu0 %v1008
        %1066 = vmatpush1.bf16.msra.mxu0 %v1007
        %1067 = vmatprep.subr.bf16.mxu0 %v1006
        %1068 = vmatpush1.bf16.msra.mxu0 %v1005
        %1069 = vmatprep.subr.bf16.mxu0 0
        %1070 = vmatpush2.bf16.msra.mxu0 0
        %1071 = vmatprep.subr.bf16.mxu0 0
        %1072 = vmatpush2.bf16.msra.mxu0 0
        %1073 = vmatprep.subr.bf16.mxu0 0
        %1074 = vmatpush2.bf16.msra.mxu0 0
        %1075 = vmatprep.subr.bf16.mxu0 0
        %1076 = vmatpush2.bf16.msra.mxu0 0
        %1077 = vmatprep.subr.bf16.mxu0 0
        %1078 = vmatpush2.bf16.msra.mxu0 0
        %1079 = vmatprep.subr.bf16.mxu0 0
        %1080 = vmatpush2.bf16.msra.mxu0 0
        %1081 = vmatprep.subr.bf16.mxu0 0
        %1082 = vmatpush2.bf16.msra.mxu0 0
        %1083 = vmatprep.subr.bf16.mxu0 0
        %1084 = vmatpush2.bf16.msra.mxu0 0
        %1085 = vmatprep.mubr.bf16.mxu0 0
        %1086 = vmatmul.mubr.bf16.gmra.mxu0 %v1048
        %v1087 = vpop.f32.mrf.mxu0
        %v1088 = vadd.f32 %v1020, %v1087
        %v1089 = vpop.f32.mrf.mxu0
        %v1090 = vadd.f32 %v1020, %v1089
        %v1091 = vpop.f32.mrf.mxu0
        %v1092 = vadd.f32 %v1025, %v1091
        %v1093 = vpop.f32.mrf.mxu0
        %v1094 = vadd.f32 %v1025, %v1093
        %1095 = vmatprep.mubr.bf16.mxu0 0
        %1096 = vmatmul.mubr.bf16.gmra.mxu0 %v1051
        %v1097 = vpop.f32.mrf.mxu0
        %v1098 = vadd.f32 %v1030, %v1097
        %v1099 = vpop.f32.mrf.mxu0
        %v1100 = vadd.f32 %v1030, %v1099
        %v1101 = vpop.f32.mrf.mxu0
        %v1102 = vadd.f32 %v1035, %v1101
        %v1103 = vpop.f32.mrf.mxu0
        %v1104 = vadd.f32 %v1035, %v1103
        %1105 = vdwg.mxu0
        %1106 = vst [vmem:[%s432] sm:$0xff] %v1088
        %1107 = vst [vmem:[%s432 + $0x8] sm:$0xff] %v1090
        %1108 = vst [vmem:[%s432 + $0x10] sm:$0xff] %v1092
        %1109 = vst [vmem:[%s432 + $0x18] sm:$0xff] %v1094
        %1110 = vst [vmem:[%s432 + $0x20] sm:$0xff] %v1098
        %1111 = vst [vmem:[%s432 + $0x28] sm:$0xff] %v1100
        %1112 = vst [vmem:[%s432 + $0x30] sm:$0xff] %v1102
        %1113 = vst [vmem:[%s432 + $0x38] sm:$0xff] %v1104
        %s1114 = sand.u32 %s269, 1
        %s1115 = scalar_lea.sflag [#allocation4], %s1114
        %s1116 = sand.u32 %s269, 1
        %s1117 = smul.addr %s1116, 64
        %s1118 = scalar_lea.vmem [#allocation3], %s1117
        // Predicated region
        $region103: #{tpu_custom_call.1} parent=97 // pred_check
          %p1119 = pneg %p279
        $region104: #{tpu_custom_call.1} parent=97 // pred_check_branch
          %1121 = sbr.rel (%p1119) target = $region106
        $region105: #{tpu_custom_call.1} parent=97 // pred_region
          %s1122 = smul.u32 2, %s25
          %s1124 = ssub.s32 1024, 1024
          %1125 = vsyncadd %s1115, %s1124
          %s1126 = smul.addr %s1122, 128
          %s1127 = scalar_lea.hbm %s11, %s1126
          %s1128 = sshll.u32 %s1118, 4
          %s1129 = int_to_ptr.vmem [resolvable:$true] %s1128
          %1134 = dma.vmem_to_hbm [thread:$0]  %s1129, 1024, %s1127, %s1115, 256, 512, 16
        $region106: #{tpu_custom_call.1} parent=97 // pred_fallthru
          _
      $region98: #{tpu_custom_call.1} parent=5 // pred_fallthru
        _
      %p1135 = scmp.le.s32.totalorder 2, %s20
      // Predicated region
      $region107: #{tpu_custom_call.1} parent=5 // pred_check
        %p1136 = pneg %p1135
      $region108: #{tpu_custom_call.1} parent=5 // pred_check_branch
        %1138 = sbr.rel (%p1136) target = $region110
      $region109: #{tpu_custom_call.1} parent=5 // pred_region
        %s1139 = ssub.s32 %s20, 2
        // Predicated region
        $region111: #{tpu_custom_call.1} parent=109 // pred_check
          %p1140 = pneg %p285
        $region112: #{tpu_custom_call.1} parent=109 // pred_check_branch
          %1142 = sbr.rel (%p1140) target = $region114
        $region113: #{tpu_custom_call.1} parent=109 // pred_region
          %s1143 = sand.u32 %s270, 1
          %s1144 = scalar_lea.sflag [#allocation4], %s1143
          %s1145 = sand.u32 %s270, 1
          %s1146 = smul.addr %s1145, 64
          %s1147 = scalar_lea.vmem [#allocation3], %s1146
          %1148 = dma.done %s1144, 1024
        $region114: #{tpu_custom_call.1} parent=109 // pred_fallthru
          _
      $region110: #{tpu_custom_call.1} parent=5 // pred_fallthru
        _
    $region6: #{tpu_custom_call.1} parent=1 // loop_footer
      %s24 = sadd.s32 1, %s20
    $region7: #{tpu_custom_call.1} parent=1 // loop_footer_branch
      %19 = sbr.rel target = $region3
    $region8: #{tpu_custom_call.1} parent=1 // loop_exit
      _
    %1149 = vsyncpa [#allocation4], 1
    %s1150 = scalar_lea.sflag [#allocation4], 1
    %1151 = vsyncpa %s1150, 1

</llo_original>
